<compile_context>
chip_gen: v6e
topology: v6e:2x2x1
jax: 0.10.0
libtpu: 0.0.40
codegen_flags: <defaults>
</compile_context>

<pallas_src>
import functools

import jax
import jax.numpy as jnp
from jax.experimental import pallas as pl
from jax.experimental.pallas import tpu as pltpu


def _round_up(x, m):
    return ((x + m - 1) // m) * m


def _mlp_kernel(x_ref, w1_ref, b1_ref, w2_ref, b2_ref, w3_ref, b3_ref, o_ref):
    """Whole 3-layer FC network for one batch tile.

    Matmuls run in bf16 on the MXU with f32 accumulation; bias-add / ReLU are
    done in f32 on the VPU, then re-cast to bf16 for the next layer's matmul.
    """
    x = x_ref[...].astype(jnp.bfloat16)                       # cast in-kernel
    # Layer 1: Linear + ReLU
    h = jnp.dot(x, w1_ref[...], preferred_element_type=jnp.float32)
    h = jnp.maximum(h + b1_ref[...], 0.0)                     # f32
    # Layer 2: Linear + ReLU
    h = jnp.dot(h.astype(jnp.bfloat16), w2_ref[...],
                preferred_element_type=jnp.float32)
    h = jnp.maximum(h + b2_ref[...], 0.0)                     # f32
    # Output layer: Linear (no nonlinearity)
    y = jnp.dot(h.astype(jnp.bfloat16), w3_ref[...],
                preferred_element_type=jnp.float32) + b3_ref[...]
    o_ref[...] = y.astype(o_ref.dtype)


def _pick_tiling(B):
    """Return (batch_tile, grid_len)."""
    if B <= 128:
        # Single grid step: block = full batch dim (always a legal block).
        return B, 1
    # Even number (>= 2) of grid steps so both v7x TensorCores get work via
    # dimension_semantics=("parallel",); tiles of up to ~1024 rows amortize the
    # ~0.35 us per-grid-step overhead on single-TC v5e/v6e.  VMEM footprint per
    # tile stays at a few MiB, well under the scoped limit on every generation.
    steps = _round_up(max(2, pl.cdiv(B, 1024)), 2)
    tile = _round_up(pl.cdiv(B, steps), 8)
    return tile, steps


def prepare_fc_params(params):
    """One-time parameter prep (call once, OUTSIDE the per-step path):
    weights -> bf16 (in, out) layout, biases -> (1, H) f32.

    Hidden dims of 256 are already lane-aligned and the d_in / d_out axes use
    full-dim blocks inside the kernel, so no padding is required."""
    prepped = {}
    for i in (1, 2, 3):
        prepped[f"w{i}"] = jnp.asarray(params[f"w{i}"], jnp.bfloat16)
        prepped[f"b{i}"] = jnp.asarray(params[f"b{i}"], jnp.float32).reshape(1, -1)
    return prepped


@functools.partial(jax.jit, static_argnames=("batch_tile",))
def fc_network_forward(states, prepped_params, *, batch_tile=None):
    """Run the FCNetwork forward pass with a Pallas TPU kernel.

    states:          (B, dim_input) float32
    prepped_params:  output of prepare_fc_params (bf16 weights (in,out),
                     f32 biases (1,out))
    """
    w1, b1 = prepped_params["w1"], prepped_params["b1"]
    w2, b2 = prepped_params["w2"], prepped_params["b2"]
    w3, b3 = prepped_params["w3"], prepped_params["b3"]

    B, d_in = states.shape
    h1 = w1.shape[1]
    h2 = w2.shape[1]
    d_out = w3.shape[1]

    if batch_tile is None:
        batch_tile, grid_len = _pick_tiling(B)
    else:
        batch_tile = max(8, _round_up(int(batch_tile), 8))
        grid_len = pl.cdiv(B, batch_tile)
    B_p = batch_tile * grid_len

    x = states.astype(jnp.float32)
    if B_p != B:
        # Zero-pad only the batch dim (no-op for the common case B_p == B).
        x = jnp.pad(x, ((0, B_p - B), (0, 0)))

    # Constant index_map: weights/biases are DMA'd once and revisited on every
    # grid step (the whole net is well under 1 MB in bf16).
    def const(shape):
        return pl.BlockSpec(shape, lambda i: (0, 0))

    weight_bytes = 2 * (d_in * h1 + h1 * h2 + h2 * d_out) + 4 * (h1 + h2 + d_out)
    cost = pl.CostEstimate(
        flops=2 * B_p * (d_in * h1 + h1 * h2 + h2 * d_out),
        transcendentals=0,
        bytes_accessed=B_p * d_in * 4 + B_p * d_out * 4 + weight_bytes,
    )

    out = pl.pallas_call(
        _mlp_kernel,
        out_shape=jax.ShapeDtypeStruct((B_p, d_out), jnp.float32),
        grid_spec=pltpu.PrefetchScalarGridSpec(
            num_scalar_prefetch=0,
            grid=(grid_len,),
            in_specs=[
                # Raw f32 activations; full-dim last axis (legal for any d_in).
                pl.BlockSpec((batch_tile, d_in), lambda i: (i, 0)),
                const((d_in, h1)),
                const((1, h1)),
                const((h1, h2)),
                const((1, h2)),
                const((h2, d_out)),
                const((1, d_out)),
            ],
            # Narrow (un-padded) f32 output: 8x fewer HBM bytes than a
            # 128-lane padded f32 output and no wrapper slice pass.
            out_specs=pl.BlockSpec((batch_tile, d_out), lambda i: (i, 0)),
        ),
        compiler_params=pltpu.CompilerParams(
            dimension_semantics=("parallel",),
        ),
        cost_estimate=cost,
    )(x, w1, b1, w2, b2, w3, b3)

    if B_p != B:
        out = out[:B]
    return out


def init_fc_network_params(key, dim_input, dim_output, layers=(256, 256),
                           dtype=jnp.float32):
    """Deterministic init mimicking torch.nn.Linear default:
    U(-1/sqrt(fan_in), 1/sqrt(fan_in)) for weight and bias."""
    dims = [dim_input, *layers, dim_output]
    params = {}
    for idx in range(len(dims) - 1):
        fan_in, fan_out = dims[idx], dims[idx + 1]
        key, kw, kb = jax.random.split(key, 3)
        bound = 1.0 / jnp.sqrt(jnp.asarray(fan_in, dtype))
        # Stored as (in, out)  ==  torch weight (out, in) transposed.
        w = jax.random.uniform(kw, (fan_in, fan_out), dtype, -bound, bound)
        b = jax.random.uniform(kb, (1, fan_out), dtype, -bound, bound)
        params[f"w{idx + 1}"] = w
        params[f"b{idx + 1}"] = b
    return params


def fc_network_reference(states, params):
    """Pure-JAX f32 reference (same math as the torch Sequential)."""
    h = jnp.maximum(states @ params["w1"] + params["b1"], 0.0)
    h = jnp.maximum(h @ params["w2"] + params["b2"], 0.0)
    return h @ params["w3"] + params["b3"]


def fc_network_reference_bf16(states, params):
    """Pure-JAX reference following the exact dtype path of the kernel
    (bf16 matmul operands, f32 accumulation / bias / ReLU / output)."""
    x = states.astype(jnp.bfloat16)
    w1 = params["w1"].astype(jnp.bfloat16)
    w2 = params["w2"].astype(jnp.bfloat16)
    w3 = params["w3"].astype(jnp.bfloat16)
    b1 = params["b1"].astype(jnp.float32)
    b2 = params["b2"].astype(jnp.float32)
    b3 = params["b3"].astype(jnp.float32)
    h = jnp.dot(x, w1, preferred_element_type=jnp.float32) + b1
    h = jnp.maximum(h, 0.0).astype(jnp.bfloat16)
    h = jnp.dot(h, w2, preferred_element_type=jnp.float32) + b2
    h = jnp.maximum(h, 0.0).astype(jnp.bfloat16)
    return jnp.dot(h, w3, preferred_element_type=jnp.float32) + b3


# TODO(synk): dropout > 0 variant (torch.nn.Dropout) not implemented; the
# default dropout=0 module has no dropout layers, so forward semantics match.


if __name__ == "__main__":
    key = jax.random.PRNGKey(0)
    k_params, k_x = jax.random.split(key)

    batch = 16
    dim_input = 32
    dim_output = 16
    hidden = (256, 256)

    params = init_fc_network_params(k_params, dim_input, dim_output, hidden)
    states = jax.random.normal(k_x, (batch, dim_input), jnp.float32)

    # Hoisted one-time parameter prep (bf16 cast + (1,H) bias layout).
    prepped = prepare_fc_params(params)

    out = fc_network_forward(states, prepped)
    out = jax.block_until_ready(out)
    assert out.shape == (batch, dim_output), out.shape

    # Tight check against a reference that follows the kernel's dtype path.
    ref_bf16 = fc_network_reference_bf16(states, params)
    assert jnp.allclose(out, ref_bf16, atol=1e-3, rtol=1e-3), \
        "mismatch vs bf16-path reference"

    # Looser sanity check against the full-f32 reference (bf16 operand rounding).
    ref_f32 = fc_network_reference(states, params)
    assert jnp.allclose(out, ref_f32, atol=1e-1, rtol=1e-1), \
        "mismatch vs f32 reference"

    print("KERNEL_OK")
</pallas_src>

<mosaic_0001>
module attributes {stable_mosaic.version = 11 : i64} {
  func.func @_mlp_kernel(%arg0: i32, %arg1: memref<16x32xf32, #tpu.memory_space<vmem>>, %arg2: memref<32x256xbf16, #tpu.memory_space<vmem>>, %arg3: memref<1x256xf32, #tpu.memory_space<vmem>>, %arg4: memref<256x256xbf16, #tpu.memory_space<vmem>>, %arg5: memref<1x256xf32, #tpu.memory_space<vmem>>, %arg6: memref<256x16xbf16, #tpu.memory_space<vmem>>, %arg7: memref<1x16xf32, #tpu.memory_space<vmem>>, %arg8: memref<16x16xf32, #tpu.memory_space<vmem>>) attributes {dimension_semantics = [#tpu.dimension_semantics<parallel>], iteration_bounds = array<i64: 1>, scalar_prefetch = 0 : i64, scratch_operands = 0 : i64, tpu.core_type = #tpu.core_type<tc>, window_params = [{transform_indices = @transform_0, window_bounds = array<i64: 16, 32>}, {pipeline_mode = #tpu.pipeline_mode<synchronous>, transform_indices = @transform_1, window_bounds = array<i64: 32, 256>}, {pipeline_mode = #tpu.pipeline_mode<synchronous>, transform_indices = @transform_2, window_bounds = array<i64: 1, 256>}, {pipeline_mode = #tpu.pipeline_mode<synchronous>, transform_indices = @transform_3, window_bounds = array<i64: 256, 256>}, {pipeline_mode = #tpu.pipeline_mode<synchronous>, transform_indices = @transform_4, window_bounds = array<i64: 1, 256>}, {pipeline_mode = #tpu.pipeline_mode<synchronous>, transform_indices = @transform_5, window_bounds = array<i64: 256, 16>}, {pipeline_mode = #tpu.pipeline_mode<synchronous>, transform_indices = @transform_6, window_bounds = array<i64: 1, 16>}, {transform_indices = @transform_7, window_bounds = array<i64: 16, 16>}]} {
    %c0 = arith.constant 0 : index
    %c0_0 = arith.constant 0 : index
    %0 = vector.load %arg1[%c0, %c0_0] : memref<16x32xf32, #tpu.memory_space<vmem>>, vector<16x32xf32>
    %1 = arith.truncf %0 : vector<16x32xf32> to vector<16x32xbf16>
    %c0_1 = arith.constant 0 : index
    %c0_2 = arith.constant 0 : index
    %2 = vector.load %arg2[%c0_1, %c0_2] : memref<32x256xbf16, #tpu.memory_space<vmem>>, vector<32x256xbf16>
    %cst = arith.constant dense<0.000000e+00> : vector<16x256xf32>
    %3 = tpu.matmul %1, %2, %cst {dimension_numbers = #tpu.dot_dimension_numbers<[1], [0], [0], [1], [0, 0, 1, 1], [], []>} : vector<16x32xbf16>, vector<32x256xbf16>, vector<16x256xf32> -> vector<16x256xf32>
    %c0_3 = arith.constant 0 : index
    %c0_4 = arith.constant 0 : index
    %4 = vector.load %arg3[%c0_3, %c0_4] : memref<1x256xf32, #tpu.memory_space<vmem>>, vector<1x256xf32>
    %5 = vector.broadcast %4 : vector<1x256xf32> to vector<16x256xf32>
    %6 = arith.addf %3, %5 : vector<16x256xf32>
    %cst_5 = arith.constant 0.000000e+00 : f32
    %7 = vector.broadcast %cst_5 : f32 to vector<16x256xf32>
    %8 = arith.maximumf %6, %7 : vector<16x256xf32>
    %9 = arith.truncf %8 : vector<16x256xf32> to vector<16x256xbf16>
    %c0_6 = arith.constant 0 : index
    %c0_7 = arith.constant 0 : index
    %10 = vector.load %arg4[%c0_6, %c0_7] : memref<256x256xbf16, #tpu.memory_space<vmem>>, vector<256x256xbf16>
    %cst_8 = arith.constant dense<0.000000e+00> : vector<16x256xf32>
    %11 = tpu.matmul %9, %10, %cst_8 {dimension_numbers = #tpu.dot_dimension_numbers<[1], [0], [0], [1], [0, 0, 1, 1], [], []>} : vector<16x256xbf16>, vector<256x256xbf16>, vector<16x256xf32> -> vector<16x256xf32>
    %c0_9 = arith.constant 0 : index
    %c0_10 = arith.constant 0 : index
    %12 = vector.load %arg5[%c0_9, %c0_10] : memref<1x256xf32, #tpu.memory_space<vmem>>, vector<1x256xf32>
    %13 = vector.broadcast %12 : vector<1x256xf32> to vector<16x256xf32>
    %14 = arith.addf %11, %13 : vector<16x256xf32>
    %cst_11 = arith.constant 0.000000e+00 : f32
    %15 = vector.broadcast %cst_11 : f32 to vector<16x256xf32>
    %16 = arith.maximumf %14, %15 : vector<16x256xf32>
    %17 = arith.truncf %16 : vector<16x256xf32> to vector<16x256xbf16>
    %c0_12 = arith.constant 0 : index
    %c0_13 = arith.constant 0 : index
    %18 = vector.load %arg6[%c0_12, %c0_13] : memref<256x16xbf16, #tpu.memory_space<vmem>>, vector<256x16xbf16>
    %cst_14 = arith.constant dense<0.000000e+00> : vector<16x16xf32>
    %19 = tpu.matmul %17, %18, %cst_14 {dimension_numbers = #tpu.dot_dimension_numbers<[1], [0], [0], [1], [0, 0, 1, 1], [], []>} : vector<16x256xbf16>, vector<256x16xbf16>, vector<16x16xf32> -> vector<16x16xf32>
    %c0_15 = arith.constant 0 : index
    %c0_16 = arith.constant 0 : index
    %20 = vector.load %arg7[%c0_15, %c0_16] : memref<1x16xf32, #tpu.memory_space<vmem>>, vector<1x16xf32>
    %21 = vector.broadcast %20 : vector<1x16xf32> to vector<16x16xf32>
    %22 = arith.addf %19, %21 : vector<16x16xf32>
    %c0_17 = arith.constant 0 : index
    %c0_18 = arith.constant 0 : index
    %23 = vector.load %arg8[%c0_17, %c0_18] : memref<16x16xf32, #tpu.memory_space<vmem>>, vector<16x16xf32>
    tpu.vector_store %arg8[%c0_17, %c0_18], %22 {strides = array<i32>} : memref<16x16xf32, #tpu.memory_space<vmem>>, vector<16x16xf32>,
    return
  }
  func.func @transform_0(%arg0: i32) -> (i32, i32) {
    %c0_i32 = arith.constant 0 : i32
    %c0_i32_0 = arith.constant 0 : i32
    return %arg0, %c0_i32 : i32, i32
  }
  func.func @transform_1(%arg0: i32) -> (i32, i32) {
    %c0_i32 = arith.constant 0 : i32
    %c0_i32_0 = arith.constant 0 : i32
    %c0_i32_1 = arith.constant 0 : i32
    return %c0_i32, %c0_i32_0 : i32, i32
  }
  func.func @transform_2(%arg0: i32) -> (i32, i32) {
    %c0_i32 = arith.constant 0 : i32
    %c0_i32_0 = arith.constant 0 : i32
    %c0_i32_1 = arith.constant 0 : i32
    return %c0_i32, %c0_i32_0 : i32, i32
  }
  func.func @transform_3(%arg0: i32) -> (i32, i32) {
    %c0_i32 = arith.constant 0 : i32
    %c0_i32_0 = arith.constant 0 : i32
    %c0_i32_1 = arith.constant 0 : i32
    return %c0_i32, %c0_i32_0 : i32, i32
  }
  func.func @transform_4(%arg0: i32) -> (i32, i32) {
    %c0_i32 = arith.constant 0 : i32
    %c0_i32_0 = arith.constant 0 : i32
    %c0_i32_1 = arith.constant 0 : i32
    return %c0_i32, %c0_i32_0 : i32, i32
  }
  func.func @transform_5(%arg0: i32) -> (i32, i32) {
    %c0_i32 = arith.constant 0 : i32
    %c0_i32_0 = arith.constant 0 : i32
    %c0_i32_1 = arith.constant 0 : i32
    return %c0_i32, %c0_i32_0 : i32, i32
  }
  func.func @transform_6(%arg0: i32) -> (i32, i32) {
    %c0_i32 = arith.constant 0 : i32
    %c0_i32_0 = arith.constant 0 : i32
    %c0_i32_1 = arith.constant 0 : i32
    return %c0_i32, %c0_i32_0 : i32, i32
  }
  func.func @transform_7(%arg0: i32) -> (i32, i32) {
    %c0_i32 = arith.constant 0 : i32
    %c0_i32_0 = arith.constant 0 : i32
    return %arg0, %c0_i32 : i32, i32
  }
}

</mosaic_0001>

<llo_original>
// kernel: fc_network_forward.1
$region0: #{fc_network_forward.1}
  #allocation0 [shape = 'u32[]', space=smem, size = 0x4, offset = 0x4, fixed_abs, tag = 'smem constant byte address 0x4 - core index']
  #allocation1 [shape = 'u32[144,128]{1,0:T(1,128)}', space=vmem, size = 0x12000, scoped, tag = 'internal scratch']
  %s0 = inlined_call_operand.vmem [shape: f32[16,32], index: 0, kind: input, shape index: {}]
  %s1 = inlined_call_operand.vmem [shape: bf16[32,256], index: 1, kind: input, shape index: {}]
  %s2 = inlined_call_operand.vmem [shape: f32[1,256], index: 2, kind: input, shape index: {}]
  %s3 = inlined_call_operand.hbm [shape: bf16[256,256], index: 3, kind: input, shape index: {}]
  %s4 = inlined_call_operand.vmem [shape: f32[1,256], index: 4, kind: input, shape index: {}]
  %s5 = inlined_call_operand.vmem [shape: bf16[256,16], index: 5, kind: input, shape index: {}]
  %s6 = inlined_call_operand.vmem [shape: f32[1,16], index: 6, kind: input, shape index: {}]
  %s7 = inlined_call_operand.hbm [shape: f32[16,16], index: 7, kind: output, shape index: {}]
  %s8 = sld [smem:[#allocation0]]
  $region42: #{fc_network_forward.1} parent=0
    _
  %s10 = ssub.s32 1, %s8
  %s11 = scalar_select 0, %s10, %s8
  $region1: #{fc_network_forward.1} parent=0
    #allocation2 [shape = 'u8[131072]{0}', space=vmem, size = 0x20000, scoped, tag = 'input window, operand 3, single buffered']
    #allocation3 [shape = 's32[1]{0}', space=sflag, size = 0x4, scoped, tag = 'scoped memory for fc_network_forward.1']
    #allocation4 [shape = 's32[1]{0}', space=sflag, size = 0x4, scoped, tag = 'scoped memory for fc_network_forward.1']
    #allocation5 [shape = 'u8[8192]{0}', space=vmem, size = 0x2000, scoped, tag = 'output window, operand 0, single buffered']
    %12 = vsyncpa [#allocation3], 0
    %13 = vsyncpa [#allocation4], 0
    // Predicated region
    $region2: #{fc_network_forward.1} parent=1 // pred_check
      _
    $region3: #{fc_network_forward.1} parent=1 // pred_check_branch
      %15 = sbr.rel (0) target = $region5
    $region4: #{fc_network_forward.1} parent=1 // pred_region
      _
    $region5: #{fc_network_forward.1} parent=1 // pred_fallthru
      _
    // Predicated region
    $region6: #{fc_network_forward.1} parent=1 // pred_check
      _
    $region7: #{fc_network_forward.1} parent=1 // pred_check_branch
      %17 = sbr.rel (0) target = $region9
    $region8: #{fc_network_forward.1} parent=1 // pred_region
      _
    $region9: #{fc_network_forward.1} parent=1 // pred_fallthru
      _
    // Predicated region
    $region10: #{fc_network_forward.1} parent=1 // pred_check
      _
    $region11: #{fc_network_forward.1} parent=1 // pred_check_branch
      %19 = sbr.rel (0) target = $region13
    $region12: #{fc_network_forward.1} parent=1 // pred_region
      _
    $region13: #{fc_network_forward.1} parent=1 // pred_fallthru
      _
    // Predicated region
    $region14: #{fc_network_forward.1} parent=1 // pred_check
      _
    $region15: #{fc_network_forward.1} parent=1 // pred_check_branch
      %21 = sbr.rel (0) target = $region17
    $region16: #{fc_network_forward.1} parent=1 // pred_region
      %s23 = ssub.s32 4096, 4096
      %24 = vsyncadd [#allocation3], %s23
      %s25 = sshll.u32 [#allocation2], 4
      %s26 = int_to_ptr.vmem [resolvable:$true] %s25
      %31 = dma.hbm_to_vmem [thread:$0]  %s3, 4096, %s26, [#allocation3], 128, 128, 8
    $region17: #{fc_network_forward.1} parent=1 // pred_fallthru
      _
    // Predicated region
    $region18: #{fc_network_forward.1} parent=1 // pred_check
      _
    $region19: #{fc_network_forward.1} parent=1 // pred_check_branch
      %33 = sbr.rel (0) target = $region21
    $region20: #{fc_network_forward.1} parent=1 // pred_region
      _
    $region21: #{fc_network_forward.1} parent=1 // pred_fallthru
      _
    // Predicated region
    $region22: #{fc_network_forward.1} parent=1 // pred_check
      _
    $region23: #{fc_network_forward.1} parent=1 // pred_check_branch
      %35 = sbr.rel (0) target = $region25
    $region24: #{fc_network_forward.1} parent=1 // pred_region
      _
    $region25: #{fc_network_forward.1} parent=1 // pred_fallthru
      _
    // Predicated region
    $region26: #{fc_network_forward.1} parent=1 // pred_check
      _
    $region27: #{fc_network_forward.1} parent=1 // pred_check_branch
      %37 = sbr.rel (0) target = $region29
    $region28: #{fc_network_forward.1} parent=1 // pred_region
      _
    $region29: #{fc_network_forward.1} parent=1 // pred_fallthru
      _
    // Predicated region
    $region30: #{fc_network_forward.1} parent=1 // pred_check
      _
    $region31: #{fc_network_forward.1} parent=1 // pred_check_branch
      %39 = sbr.rel (0) target = $region33
    $region32: #{fc_network_forward.1} parent=1 // pred_region
      %40 = dma.done [#allocation3], 4096
    $region33: #{fc_network_forward.1} parent=1 // pred_fallthru
      _
    %v42 = vld [vmem:[%s0] sm:$0xff]
    %v43 = vld [vmem:[%s0 + $0x8] sm:$0xff]
    %v44 = vpack.c.bf16 %v43, %v42
    %v45 = vld [vmem:[%s1] sm:$0xff]
    %v46 = vld [vmem:[%s1 + $0x8] sm:$0xff]
    %v47 = vld [vmem:[%s1 + $0x10] sm:$0xff]
    %v48 = vld [vmem:[%s1 + $0x18] sm:$0xff]
    %v49 = vld [vmem:[%s2] sm:$0x3]
    %v51 = vlaneseq
    %v52 = vshrl.u32 %v51, 7
    %v53 = vsub.s32 0, %v52
    %v54 = vrot.slane %v49, %v53
    %v55 = vlaneseq
    %v56 = vshrl.u32 %v55, 7
    %v57 = vsub.s32 1, %v56
    %v58 = vrot.slane %v49, %v57
    %v65 = vunpack.c.l.b16 %v45
    %v66 = vunpack.c.h.b16 %v45
    %v67 = vunpack.c.l.b16 %v46
    %v68 = vunpack.c.h.b16 %v46
    %v69 = vunpack.c.l.b16 %v47
    %v70 = vunpack.c.h.b16 %v47
    %v71 = vunpack.c.l.b16 %v48
    %v72 = vunpack.c.h.b16 %v48
    %v73 = vpack.c.b16 %v67, %v65
    %v74 = vpack.c.b16 %v68, %v66
    %v75 = vpack.c.b16 %v71, %v69
    %v76 = vpack.c.b16 %v72, %v70
    %vm81 = vcmask 261120
    %v83 = vsel %vm81, %v44, 0
    %85 = vmatprep.subr.bf16.mxu0 0
    %86 = vmatpush1.bf16.msra.mxu0 0
    %87 = vmatprep.subr.bf16.mxu0 0
    %88 = vmatpush1.bf16.msra.mxu0 0
    %89 = vmatprep.subr.bf16.mxu0 0
    %90 = vmatpush1.bf16.msra.mxu0 0
    %91 = vmatprep.subr.bf16.mxu0 0
    %92 = vmatpush1.bf16.msra.mxu0 0
    %93 = vmatprep.subr.bf16.mxu0 0
    %94 = vmatpush1.bf16.msra.mxu0 0
    %95 = vmatprep.subr.bf16.mxu0 0
    %96 = vmatpush1.bf16.msra.mxu0 0
    %97 = vmatprep.subr.bf16.mxu0 %v76
    %98 = vmatpush1.bf16.msra.mxu0 %v75
    %99 = vmatprep.subr.bf16.mxu0 %v74
    %100 = vmatpush1.bf16.msra.mxu0 %v73
    %101 = vmatprep.subr.bf16.mxu0 0
    %102 = vmatpush2.bf16.msra.mxu0 0
    %103 = vmatprep.subr.bf16.mxu0 0
    %104 = vmatpush2.bf16.msra.mxu0 0
    %105 = vmatprep.subr.bf16.mxu0 0
    %106 = vmatpush2.bf16.msra.mxu0 0
    %107 = vmatprep.subr.bf16.mxu0 0
    %108 = vmatpush2.bf16.msra.mxu0 0
    %109 = vmatprep.subr.bf16.mxu0 0
    %110 = vmatpush2.bf16.msra.mxu0 0
    %111 = vmatprep.subr.bf16.mxu0 0
    %112 = vmatpush2.bf16.msra.mxu0 0
    %113 = vmatprep.subr.bf16.mxu0 0
    %114 = vmatpush2.bf16.msra.mxu0 0
    %115 = vmatprep.subr.bf16.mxu0 0
    %116 = vmatpush2.bf16.msra.mxu0 0
    %117 = vmatprep.mubr.bf16.mxu0 0
    %118 = vmatmul.mubr.bf16.gmra.mxu0 %v83
    %v119 = vpop.f32.mrf.mxu0
    %v120 = vadd.f32 %v54, %v119
    %v121 = vpop.f32.mrf.mxu0
    %v122 = vadd.f32 %v58, %v121
    %v123 = vpop.f32.mrf.mxu0
    %v124 = vadd.f32 %v54, %v123
    %v125 = vpop.f32.mrf.mxu0
    %v126 = vadd.f32 %v58, %v125
    %127 = vdwg.mxu0
    %v128 = vmax.f32 %v120, 0.0
    %v129 = vmax.f32 %v122, 0.0
    %v130 = vmax.f32 %v124, 0.0
    %v131 = vmax.f32 %v126, 0.0
    %v132 = vpack.c.bf16 %v130, %v128
    %v133 = vpack.c.bf16 %v131, %v129
    %v134 = vld [vmem:[#allocation2] sm:$0xff]
    %v135 = vld [vmem:[#allocation2 + $0x8] sm:$0xff]
    %v136 = vld [vmem:[#allocation2 + $0x10] sm:$0xff]
    %v137 = vld [vmem:[#allocation2 + $0x18] sm:$0xff]
    %v138 = vld [vmem:[#allocation2 + $0x20] sm:$0xff]
    %v139 = vld [vmem:[#allocation2 + $0x28] sm:$0xff]
    %v140 = vld [vmem:[#allocation2 + $0x30] sm:$0xff]
    %v141 = vld [vmem:[#allocation2 + $0x38] sm:$0xff]
    %v142 = vld [vmem:[#allocation2 + $0x40] sm:$0xff]
    %v143 = vld [vmem:[#allocation2 + $0x48] sm:$0xff]
    %v144 = vld [vmem:[#allocation2 + $0x50] sm:$0xff]
    %v145 = vld [vmem:[#allocation2 + $0x58] sm:$0xff]
    %v146 = vld [vmem:[#allocation2 + $0x60] sm:$0xff]
    %v147 = vld [vmem:[#allocation2 + $0x68] sm:$0xff]
    %v148 = vld [vmem:[#allocation2 + $0x70] sm:$0xff]
    %v149 = vld [vmem:[#allocation2 + $0x78] sm:$0xff]
    %v150 = vld [vmem:[#allocation2 + $0x80] sm:$0xff]
    %v151 = vld [vmem:[#allocation2 + $0x88] sm:$0xff]
    %v152 = vld [vmem:[#allocation2 + $0x90] sm:$0xff]
    %v153 = vld [vmem:[#allocation2 + $0x98] sm:$0xff]
    %v154 = vld [vmem:[#allocation2 + $0xa0] sm:$0xff]
    %v155 = vld [vmem:[#allocation2 + $0xa8] sm:$0xff]
    %v156 = vld [vmem:[#allocation2 + $0xb0] sm:$0xff]
    %v157 = vld [vmem:[#allocation2 + $0xb8] sm:$0xff]
    %v158 = vld [vmem:[#allocation2 + $0xc0] sm:$0xff]
    %v159 = vld [vmem:[#allocation2 + $0xc8] sm:$0xff]
    %v160 = vld [vmem:[#allocation2 + $0xd0] sm:$0xff]
    %v161 = vld [vmem:[#allocation2 + $0xd8] sm:$0xff]
    %v162 = vld [vmem:[#allocation2 + $0xe0] sm:$0xff]
    %v163 = vld [vmem:[#allocation2 + $0xe8] sm:$0xff]
    %v164 = vld [vmem:[#allocation2 + $0xf0] sm:$0xff]
    %v165 = vld [vmem:[#allocation2 + $0xf8] sm:$0xff]
    %v166 = vld [vmem:[%s4] sm:$0x3]
    %v168 = vlaneseq
    %v169 = vshrl.u32 %v168, 7
    %v170 = vsub.s32 0, %v169
    %v171 = vrot.slane %v166, %v170
    %v172 = vlaneseq
    %v173 = vshrl.u32 %v172, 7
    %v174 = vsub.s32 1, %v173
    %v175 = vrot.slane %v166, %v174
    %v210 = vunpack.c.l.b16 %v134
    %v211 = vunpack.c.h.b16 %v134
    %v212 = vunpack.c.l.b16 %v135
    %v213 = vunpack.c.h.b16 %v135
    %v214 = vunpack.c.l.b16 %v136
    %v215 = vunpack.c.h.b16 %v136
    %v216 = vunpack.c.l.b16 %v137
    %v217 = vunpack.c.h.b16 %v137
    %v218 = vunpack.c.l.b16 %v138
    %v219 = vunpack.c.h.b16 %v138
    %v220 = vunpack.c.l.b16 %v139
    %v221 = vunpack.c.h.b16 %v139
    %v222 = vunpack.c.l.b16 %v140
    %v223 = vunpack.c.h.b16 %v140
    %v224 = vunpack.c.l.b16 %v141
    %v225 = vunpack.c.h.b16 %v141
    %v226 = vunpack.c.l.b16 %v142
    %v227 = vunpack.c.h.b16 %v142
    %v228 = vunpack.c.l.b16 %v143
    %v229 = vunpack.c.h.b16 %v143
    %v230 = vunpack.c.l.b16 %v144
    %v231 = vunpack.c.h.b16 %v144
    %v232 = vunpack.c.l.b16 %v145
    %v233 = vunpack.c.h.b16 %v145
    %v234 = vunpack.c.l.b16 %v146
    %v235 = vunpack.c.h.b16 %v146
    %v236 = vunpack.c.l.b16 %v147
    %v237 = vunpack.c.h.b16 %v147
    %v238 = vunpack.c.l.b16 %v148
    %v239 = vunpack.c.h.b16 %v148
    %v240 = vunpack.c.l.b16 %v149
    %v241 = vunpack.c.h.b16 %v149
    %v242 = vunpack.c.l.b16 %v150
    %v243 = vunpack.c.h.b16 %v150
    %v244 = vunpack.c.l.b16 %v151
    %v245 = vunpack.c.h.b16 %v151
    %v246 = vunpack.c.l.b16 %v152
    %v247 = vunpack.c.h.b16 %v152
    %v248 = vunpack.c.l.b16 %v153
    %v249 = vunpack.c.h.b16 %v153
    %v250 = vunpack.c.l.b16 %v154
    %v251 = vunpack.c.h.b16 %v154
    %v252 = vunpack.c.l.b16 %v155
    %v253 = vunpack.c.h.b16 %v155
    %v254 = vunpack.c.l.b16 %v156
    %v255 = vunpack.c.h.b16 %v156
    %v256 = vunpack.c.l.b16 %v157
    %v257 = vunpack.c.h.b16 %v157
    %v258 = vunpack.c.l.b16 %v158
    %v259 = vunpack.c.h.b16 %v158
    %v260 = vunpack.c.l.b16 %v159
    %v261 = vunpack.c.h.b16 %v159
    %v262 = vunpack.c.l.b16 %v160
    %v263 = vunpack.c.h.b16 %v160
    %v264 = vunpack.c.l.b16 %v161
    %v265 = vunpack.c.h.b16 %v161
    %v266 = vunpack.c.l.b16 %v162
    %v267 = vunpack.c.h.b16 %v162
    %v268 = vunpack.c.l.b16 %v163
    %v269 = vunpack.c.h.b16 %v163
    %v270 = vunpack.c.l.b16 %v164
    %v271 = vunpack.c.h.b16 %v164
    %v272 = vunpack.c.l.b16 %v165
    %v273 = vunpack.c.h.b16 %v165
    %v274 = vpack.c.b16 %v212, %v210
    %v275 = vpack.c.b16 %v213, %v211
    %v276 = vpack.c.b16 %v216, %v214
    %v277 = vpack.c.b16 %v217, %v215
    %v278 = vpack.c.b16 %v220, %v218
    %v279 = vpack.c.b16 %v221, %v219
    %v280 = vpack.c.b16 %v224, %v222
    %v281 = vpack.c.b16 %v225, %v223
    %v282 = vpack.c.b16 %v228, %v226
    %v283 = vpack.c.b16 %v229, %v227
    %v284 = vpack.c.b16 %v232, %v230
    %v285 = vpack.c.b16 %v233, %v231
    %v286 = vpack.c.b16 %v236, %v234
    %v287 = vpack.c.b16 %v237, %v235
    %v288 = vpack.c.b16 %v240, %v238
    %v289 = vpack.c.b16 %v241, %v239
    %v290 = vpack.c.b16 %v244, %v242
    %v291 = vpack.c.b16 %v245, %v243
    %v292 = vpack.c.b16 %v248, %v246
    %v293 = vpack.c.b16 %v249, %v247
    %v294 = vpack.c.b16 %v252, %v250
    %v295 = vpack.c.b16 %v253, %v251
    %v296 = vpack.c.b16 %v256, %v254
    %v297 = vpack.c.b16 %v257, %v255
    %v298 = vpack.c.b16 %v260, %v258
    %v299 = vpack.c.b16 %v261, %v259
    %v300 = vpack.c.b16 %v264, %v262
    %v301 = vpack.c.b16 %v265, %v263
    %v302 = vpack.c.b16 %v268, %v266
    %v303 = vpack.c.b16 %v269, %v267
    %v304 = vpack.c.b16 %v272, %v270
    %v305 = vpack.c.b16 %v273, %v271
    %338 = vmatprep.subr.bf16.mxu0 %v289
    %339 = vmatpush1.bf16.msra.mxu0 %v288
    %340 = vmatprep.subr.bf16.mxu0 %v287
    %341 = vmatpush1.bf16.msra.mxu0 %v286
    %342 = vmatprep.subr.bf16.mxu0 %v285
    %343 = vmatpush1.bf16.msra.mxu0 %v284
    %344 = vmatprep.subr.bf16.mxu0 %v283
    %345 = vmatpush1.bf16.msra.mxu0 %v282
    %346 = vmatprep.subr.bf16.mxu0 %v281
    %347 = vmatpush1.bf16.msra.mxu0 %v280
    %348 = vmatprep.subr.bf16.mxu0 %v279
    %349 = vmatpush1.bf16.msra.mxu0 %v278
    %350 = vmatprep.subr.bf16.mxu0 %v277
    %351 = vmatpush1.bf16.msra.mxu0 %v276
    %352 = vmatprep.subr.bf16.mxu0 %v275
    %353 = vmatpush1.bf16.msra.mxu0 %v274
    %354 = vmatprep.subr.bf16.mxu0 %v305
    %355 = vmatpush2.bf16.msra.mxu0 %v304
    %356 = vmatprep.subr.bf16.mxu0 %v303
    %357 = vmatpush2.bf16.msra.mxu0 %v302
    %358 = vmatprep.subr.bf16.mxu0 %v301
    %359 = vmatpush2.bf16.msra.mxu0 %v300
    %360 = vmatprep.subr.bf16.mxu0 %v299
    %361 = vmatpush2.bf16.msra.mxu0 %v298
    %362 = vmatprep.subr.bf16.mxu0 %v297
    %363 = vmatpush2.bf16.msra.mxu0 %v296
    %364 = vmatprep.subr.bf16.mxu0 %v295
    %365 = vmatpush2.bf16.msra.mxu0 %v294
    %366 = vmatprep.subr.bf16.mxu0 %v293
    %367 = vmatpush2.bf16.msra.mxu0 %v292
    %368 = vmatprep.subr.bf16.mxu0 %v291
    %369 = vmatpush2.bf16.msra.mxu0 %v290
    %370 = vmatprep.mubr.bf16.mxu0 %v133
    %371 = vmatmul.mubr.bf16.gmra.mxu0 %v132
    %v372 = vpop.f32.mrf.mxu0
    %v373 = vadd.f32 %v171, %v372
    %v374 = vpop.f32.mrf.mxu0
    %v375 = vadd.f32 %v175, %v374
    %v376 = vpop.f32.mrf.mxu0
    %v377 = vadd.f32 %v171, %v376
    %v378 = vpop.f32.mrf.mxu0
    %v379 = vadd.f32 %v175, %v378
    %380 = vdwg.mxu0
    %v381 = vmax.f32 %v373, 0.0
    %v382 = vmax.f32 %v375, 0.0
    %v383 = vmax.f32 %v377, 0.0
    %v384 = vmax.f32 %v379, 0.0
    %v385 = vpack.c.bf16 %v383, %v381
    %v386 = vpack.c.bf16 %v384, %v382
    %v387 = vld [vmem:[%s5] sm:$0xf]
    %v388 = vld [vmem:[%s5 + $0x4] sm:$0xf]
    %v389 = vld [vmem:[%s5 + $0x8] sm:$0xf]
    %v390 = vld [vmem:[%s5 + $0xc] sm:$0xf]
    %v391 = vld [vmem:[%s5 + $0x10] sm:$0xf]
    %v392 = vld [vmem:[%s5 + $0x14] sm:$0xf]
    %v393 = vld [vmem:[%s5 + $0x18] sm:$0xf]
    %v394 = vld [vmem:[%s5 + $0x1c] sm:$0xf]
    %v395 = vld [vmem:[%s5 + $0x20] sm:$0xf]
    %v396 = vld [vmem:[%s5 + $0x24] sm:$0xf]
    %v397 = vld [vmem:[%s5 + $0x28] sm:$0xf]
    %v398 = vld [vmem:[%s5 + $0x2c] sm:$0xf]
    %v399 = vld [vmem:[%s5 + $0x30] sm:$0xf]
    %v400 = vld [vmem:[%s5 + $0x34] sm:$0xf]
    %v401 = vld [vmem:[%s5 + $0x38] sm:$0xf]
    %v402 = vld [vmem:[%s5 + $0x3c] sm:$0xf]
    %v403 = vld [vmem:[%s5 + $0x40] sm:$0xf]
    %v404 = vld [vmem:[%s5 + $0x44] sm:$0xf]
    %v405 = vld [vmem:[%s5 + $0x48] sm:$0xf]
    %v406 = vld [vmem:[%s5 + $0x4c] sm:$0xf]
    %v407 = vld [vmem:[%s5 + $0x50] sm:$0xf]
    %v408 = vld [vmem:[%s5 + $0x54] sm:$0xf]
    %v409 = vld [vmem:[%s5 + $0x58] sm:$0xf]
    %v410 = vld [vmem:[%s5 + $0x5c] sm:$0xf]
    %v411 = vld [vmem:[%s5 + $0x60] sm:$0xf]
    %v412 = vld [vmem:[%s5 + $0x64] sm:$0xf]
    %v413 = vld [vmem:[%s5 + $0x68] sm:$0xf]
    %v414 = vld [vmem:[%s5 + $0x6c] sm:$0xf]
    %v415 = vld [vmem:[%s5 + $0x70] sm:$0xf]
    %v416 = vld [vmem:[%s5 + $0x74] sm:$0xf]
    %v417 = vld [vmem:[%s5 + $0x78] sm:$0xf]
    %v418 = vld [vmem:[%s5 + $0x7c] sm:$0xf]
    %v419 = vld [vmem:[%s6] sm:$0x1]
    %v421 = vlaneseq
    %v422 = vshrl.u32 %v421, 7
    %v423 = vsub.s32 0, %v422
    %v424 = vrot.slane %v419, %v423
    %v458 = vunpack.c.l.b16 %v387
    %v459 = vunpack.c.l.b16 %v388
    %v460 = vunpack.c.l.b16 %v389
    %v461 = vunpack.c.l.b16 %v390
    %v462 = vunpack.c.l.b16 %v391
    %v463 = vunpack.c.l.b16 %v392
    %v464 = vunpack.c.l.b16 %v393
    %v465 = vunpack.c.l.b16 %v394
    %v466 = vunpack.c.l.b16 %v395
    %v467 = vunpack.c.l.b16 %v396
    %v468 = vunpack.c.l.b16 %v397
    %v469 = vunpack.c.l.b16 %v398
    %v470 = vunpack.c.l.b16 %v399
    %v471 = vunpack.c.l.b16 %v400
    %v472 = vunpack.c.l.b16 %v401
    %v473 = vunpack.c.l.b16 %v402
    %v474 = vunpack.c.l.b16 %v403
    %v475 = vunpack.c.l.b16 %v404
    %v476 = vunpack.c.l.b16 %v405
    %v477 = vunpack.c.l.b16 %v406
    %v478 = vunpack.c.l.b16 %v407
    %v479 = vunpack.c.l.b16 %v408
    %v480 = vunpack.c.l.b16 %v409
    %v481 = vunpack.c.l.b16 %v410
    %v482 = vunpack.c.l.b16 %v411
    %v483 = vunpack.c.l.b16 %v412
    %v484 = vunpack.c.l.b16 %v413
    %v485 = vunpack.c.l.b16 %v414
    %v486 = vunpack.c.l.b16 %v415
    %v487 = vunpack.c.l.b16 %v416
    %v488 = vunpack.c.l.b16 %v417
    %v489 = vunpack.c.l.b16 %v418
    %v490 = vpack.c.b16 %v459, %v458
    %v491 = vpack.c.b16 %v461, %v460
    %v492 = vpack.c.b16 %v463, %v462
    %v493 = vpack.c.b16 %v465, %v464
    %v494 = vpack.c.b16 %v467, %v466
    %v495 = vpack.c.b16 %v469, %v468
    %v496 = vpack.c.b16 %v471, %v470
    %v497 = vpack.c.b16 %v473, %v472
    %v498 = vpack.c.b16 %v475, %v474
    %v499 = vpack.c.b16 %v477, %v476
    %v500 = vpack.c.b16 %v479, %v478
    %v501 = vpack.c.b16 %v481, %v480
    %v502 = vpack.c.b16 %v483, %v482
    %v503 = vpack.c.b16 %v485, %v484
    %v504 = vpack.c.b16 %v487, %v486
    %v505 = vpack.c.b16 %v489, %v488
    %522 = vmatprep.subr.bf16.mxu0 0
    %523 = vmatpush1.bf16.msra.mxu0 %v497
    %524 = vmatprep.subr.bf16.mxu0 0
    %525 = vmatpush1.bf16.msra.mxu0 %v496
    %526 = vmatprep.subr.bf16.mxu0 0
    %527 = vmatpush1.bf16.msra.mxu0 %v495
    %528 = vmatprep.subr.bf16.mxu0 0
    %529 = vmatpush1.bf16.msra.mxu0 %v494
    %530 = vmatprep.subr.bf16.mxu0 0
    %531 = vmatpush1.bf16.msra.mxu0 %v493
    %532 = vmatprep.subr.bf16.mxu0 0
    %533 = vmatpush1.bf16.msra.mxu0 %v492
    %534 = vmatprep.subr.bf16.mxu0 0
    %535 = vmatpush1.bf16.msra.mxu0 %v491
    %536 = vmatprep.subr.bf16.mxu0 0
    %537 = vmatpush1.bf16.msra.mxu0 %v490
    %538 = vmatprep.subr.bf16.mxu0 0
    %539 = vmatpush2.bf16.msra.mxu0 %v505
    %540 = vmatprep.subr.bf16.mxu0 0
    %541 = vmatpush2.bf16.msra.mxu0 %v504
    %542 = vmatprep.subr.bf16.mxu0 0
    %543 = vmatpush2.bf16.msra.mxu0 %v503
    %544 = vmatprep.subr.bf16.mxu0 0
    %545 = vmatpush2.bf16.msra.mxu0 %v502
    %546 = vmatprep.subr.bf16.mxu0 0
    %547 = vmatpush2.bf16.msra.mxu0 %v501
    %548 = vmatprep.subr.bf16.mxu0 0
    %549 = vmatpush2.bf16.msra.mxu0 %v500
    %550 = vmatprep.subr.bf16.mxu0 0
    %551 = vmatpush2.bf16.msra.mxu0 %v499
    %552 = vmatprep.subr.bf16.mxu0 0
    %553 = vmatpush2.bf16.msra.mxu0 %v498
    %554 = vmatprep.mubr.bf16.mxu0 %v386
    %555 = vmatmul.mubr.bf16.gmra.mxu0 %v385
    %v556 = vpop.f32.mrf.mxu0
    %v557 = vadd.f32 %v424, %v556
    %v558 = vpop.f32.mrf.mxu0
    %v559 = vpop.f32.mrf.mxu0
    %v560 = vadd.f32 %v424, %v559
    %v561 = vpop.f32.mrf.mxu0
    %562 = vdwg.mxu0
    %vm563 = vcmask 130048
    %564 = vst.msk [vmem:[#allocation5] sm:$0xff] %vm563, %v557
    %565 = vst.msk [vmem:[#allocation5 + $0x8] sm:$0xff] %vm563, %v560
    // Predicated region
    $region34: #{fc_network_forward.1} parent=1 // pred_check
      _
    $region35: #{fc_network_forward.1} parent=1 // pred_check_branch
      %567 = sbr.rel (0) target = $region37
    $region36: #{fc_network_forward.1} parent=1 // pred_region
      %s569 = ssub.s32 256, 256
      %570 = vsyncadd [#allocation4], %s569
      %s571 = sshll.u32 [#allocation5], 4
      %s572 = int_to_ptr.vmem [resolvable:$true] %s571
      %577 = dma.vmem_to_hbm [thread:$0]  %s572, 256, %s7, [#allocation4], 128, 128, 8
    $region37: #{fc_network_forward.1} parent=1 // pred_fallthru
      _
    // Predicated region
    $region38: #{fc_network_forward.1} parent=1 // pred_check
      _
    $region39: #{fc_network_forward.1} parent=1 // pred_check_branch
      %579 = sbr.rel (0) target = $region41
    $region40: #{fc_network_forward.1} parent=1 // pred_region
      %580 = dma.done [#allocation4], 256
    $region41: #{fc_network_forward.1} parent=1 // pred_fallthru
      _
    %581 = vsyncpa [#allocation3], 1
    %582 = vsyncpa [#allocation4], 1

</llo_original>
